<compile_context>
chip_gen: v5e
topology: v5e:2x2
jax: 0.10.0
libtpu: 0.0.40
codegen_flags: <defaults>
</compile_context>

<pallas_src>
import functools

import jax
import jax.numpy as jnp
from jax.experimental import pallas as pl

EPS = 1e-5


def _fused_conv_bn_relu_kernel(x_ref, w_ref, mix_ref, gamma_ref, beta_ref, o_ref,
                               *, KH, H, inv_cnt):
    """Shapes (all resident in VMEM, single invocation):
       x_ref:     (N, Hp, Wp*Cin)       bf16  spatially pre-padded input, rows lane-flattened
       w_ref:     (KH, Wp*Cin, W*Cout)  bf16  block-Toeplitz conv weights
       mix_ref:   (W*Cout, W*Cout)      f32   per-channel fold/broadcast matrix
       gamma_ref: (1, W*Cout)           f32   BN scale, pre-tiled lane-dense
       beta_ref:  (1, W*Cout)           f32   BN shift, pre-tiled lane-dense
       o_ref:     (N, H, W*Cout)        f32   lane-dense output"""
    N = x_ref.shape[0]
    WC = o_ref.shape[-1]

    # ---- Conv: KH lane-dense block-Toeplitz MXU dots per image ---------------
    # (small static Python loops — unrolled at trace time; conv stays on-chip).
    s1 = jnp.zeros((1, WC), jnp.float32)
    s2 = jnp.zeros((1, WC), jnp.float32)
    convs = []
    for n in range(N):
        acc = jnp.zeros((H, WC), jnp.float32)
        for kh in range(KH):
            acc = acc + jnp.dot(x_ref[n, kh:kh + H, :], w_ref[kh],
                                preferred_element_type=jnp.float32)
        convs.append(acc)
        s1 = s1 + jnp.sum(acc, axis=0, keepdims=True)      # per-(w, cout) sums
        s2 = s2 + jnp.sum(acc * acc, axis=0, keepdims=True)

    # ---- BN batch statistics, folded per channel & re-broadcast, lane-dense ---
    stats = jnp.concatenate([s1, s2], axis=0)               # (2, WC)
    mixed = jnp.dot(stats, mix_ref[...],
                    preferred_element_type=jnp.float32) * inv_cnt
    mean = mixed[0:1, :]                                     # per-channel mean (bcast over w)
    var = mixed[1:2, :] - mean * mean                        # biased batch variance
    a = gamma_ref[...] * jax.lax.rsqrt(var + EPS)            # fold BN + affine into scale/shift
    c = beta_ref[...] - mean * a

    # ---- Apply scale/shift + ReLU straight from the on-chip conv results ------
    for n in range(N):
        o_ref[n] = jnp.maximum(convs[n] * a + c, 0.0)


def conv_bn_act(x_nchw, weight, bias, gamma, beta, *, padding=1):
    """PyTorch layouts: x (N,Cin,H,W); weight (Cout,Cin,KH,KW); bias/gamma/beta (Cout,)."""
    N, Cin, H, W = x_nchw.shape
    Cout, _, KH, KW = weight.shape
    del bias  # exactly cancelled by the training-mode BN mean subtraction
    Hp, Wp = H + 2 * padding, W + 2 * padding
    WC, WpC = W * Cout, Wp * Cin

    # ---- Wrapper-side layout glue (tiny, plain XLA) ---------------------------
    # NCHW -> padded NHWC in bf16 (MXU dtype), each padded row flattened to Wp*Cin.
    x = jnp.transpose(x_nchw, (0, 2, 3, 1)).astype(jnp.bfloat16)
    xp = jnp.pad(x, ((0, 0), (padding, padding), (padding, padding), (0, 0)))
    xp = xp.reshape(N, Hp, WpC)

    # Block-Toeplitz weights:
    #   T[kh, (w+kw)*Cin + ci, w*Cout + co] = weight[co, ci, kh, kw]
    # so that  conv_row(h) = sum_kh x_row(h+kh) @ T[kh]  is natively lane-dense.
    w_t = jnp.transpose(weight, (2, 3, 1, 0)).astype(jnp.float32)       # (KH,KW,Cin,Cout)
    sel = (jnp.arange(Wp)[None, :, None]
           == jnp.arange(W)[None, None, :] + jnp.arange(KW)[:, None, None]
           ).astype(jnp.float32)                                         # (KW,Wp,W)
    w_toe = (jnp.einsum('apw,haio->hpiwo', sel, w_t)
             .reshape(KH, WpC, WC).astype(jnp.bfloat16))

    # Group-mix matrix: folds per-(w,c) lane sums into per-channel sums and
    # broadcasts them back across the W groups in one tiny dot.
    ch = jnp.arange(WC) % Cout
    mix = (ch[:, None] == ch[None, :]).astype(jnp.float32)               # (WC, WC)

    gamma_ld = jnp.tile(gamma.astype(jnp.float32), W).reshape(1, WC)
    beta_ld = jnp.tile(beta.astype(jnp.float32), W).reshape(1, WC)

    kernel = functools.partial(_fused_conv_bn_relu_kernel,
                               KH=KH, H=H, inv_cnt=1.0 / float(N * H * W))

    # Single fused invocation: everything fits comfortably in VMEM, so no grid /
    # pipelining is needed and the conv activation never touches HBM.
    out_ld = pl.pallas_call(
        kernel,
        out_shape=jax.ShapeDtypeStruct((N, H, WC), jnp.float32),
    )(xp, w_toe, mix, gamma_ld, beta_ld)

    # Back to PyTorch NCHW.
    return jnp.transpose(out_ld.reshape(N, H, W, Cout), (0, 3, 1, 2))


def _reference(x_nchw, weight, bias, gamma, beta, *, padding=1):
    """Pure-JAX reference with identical semantics (bf16 conv inputs / f32
    accumulation to mirror the kernel's MXU numerics)."""
    conv = jax.lax.conv_general_dilated(
        x_nchw.astype(jnp.bfloat16), weight.astype(jnp.bfloat16),
        window_strides=(1, 1), padding=((padding, padding), (padding, padding)),
        dimension_numbers=("NCHW", "OIHW", "NCHW"),
        preferred_element_type=jnp.float32)
    conv = conv + bias.reshape(1, -1, 1, 1).astype(jnp.float32)
    mean = jnp.mean(conv, axis=(0, 2, 3), keepdims=True)
    var = jnp.mean(jnp.square(conv - mean), axis=(0, 2, 3), keepdims=True)
    y = (conv - mean) * jax.lax.rsqrt(var + EPS)
    y = y * gamma.reshape(1, -1, 1, 1) + beta.reshape(1, -1, 1, 1)
    return jnp.maximum(y, 0.0)


if __name__ == "__main__":
    key = jax.random.PRNGKey(0)
    k1, k2, k3, k4, k5 = jax.random.split(key, 5)

    N, Cin, Cout, H, W, K = 2, 4, 8, 16, 16, 3

    x = jax.random.normal(k1, (N, Cin, H, W), dtype=jnp.float32)
    # Deterministic synthetic parameters (shapes from nn.Conv2d / nn.BatchNorm2d).
    weight = jax.random.normal(k2, (Cout, Cin, K, K), dtype=jnp.float32) * 0.1
    bias = jax.random.normal(k3, (Cout,), dtype=jnp.float32) * 0.1
    gamma = 1.0 + 0.1 * jax.random.normal(k4, (Cout,), dtype=jnp.float32)
    beta = 0.1 * jax.random.normal(k5, (Cout,), dtype=jnp.float32)

    out = jax.block_until_ready(conv_bn_act(x, weight, bias, gamma, beta))

    ref = _reference(x, weight, bias, gamma, beta)
    assert out.shape == (N, Cout, H, W)
    assert bool(jnp.allclose(out, ref, atol=2e-3, rtol=2e-3)), "mismatch vs reference"

    print("KERNEL_OK")
</pallas_src>

<mosaic_0001>
module attributes {stable_mosaic.version = 11 : i64} {
  func.func @_fused_conv_bn_relu_kernel(%arg0: memref<2x18x72xbf16, #tpu.memory_space<vmem>>, %arg1: memref<3x72x128xbf16, #tpu.memory_space<vmem>>, %arg2: memref<128x128xf32, #tpu.memory_space<vmem>>, %arg3: memref<1x128xf32, #tpu.memory_space<vmem>>, %arg4: memref<1x128xf32, #tpu.memory_space<vmem>>, %arg5: memref<2x16x128xf32, #tpu.memory_space<vmem>>) attributes {dimension_semantics = [], scalar_prefetch = 0 : i64, scratch_operands = 0 : i64, tpu.core_type = #tpu.core_type<tc>} {
    %cst = arith.constant 0.000000e+00 : f32
    %0 = vector.broadcast %cst : f32 to vector<1x128xf32>
    %cst_0 = arith.constant 0.000000e+00 : f32
    %1 = vector.broadcast %cst_0 : f32 to vector<1x128xf32>
    %cst_1 = arith.constant 0.000000e+00 : f32
    %2 = vector.broadcast %cst_1 : f32 to vector<16x128xf32>
    %c0 = arith.constant 0 : index
    %c0_2 = arith.constant 0 : index
    %c0_3 = arith.constant 0 : index
    %3 = vector.load %arg0[%c0, %c0_2, %c0_3] : memref<2x18x72xbf16, #tpu.memory_space<vmem>>, vector<1x16x72xbf16>
    %4 = vector.shape_cast %3 : vector<1x16x72xbf16> to vector<16x72xbf16>
    %c0_4 = arith.constant 0 : index
    %c0_5 = arith.constant 0 : index
    %c0_6 = arith.constant 0 : index
    %5 = vector.load %arg1[%c0_4, %c0_5, %c0_6] : memref<3x72x128xbf16, #tpu.memory_space<vmem>>, vector<1x72x128xbf16>
    %6 = vector.shape_cast %5 : vector<1x72x128xbf16> to vector<72x128xbf16>
    %cst_7 = arith.constant dense<0.000000e+00> : vector<16x128xf32>
    %7 = tpu.matmul %4, %6, %cst_7 {dimension_numbers = #tpu.dot_dimension_numbers<[1], [0], [0], [1], [0, 0, 1, 1], [], []>} : vector<16x72xbf16>, vector<72x128xbf16>, vector<16x128xf32> -> vector<16x128xf32>
    %8 = arith.addf %2, %7 : vector<16x128xf32>
    %c0_8 = arith.constant 0 : index
    %c1 = arith.constant 1 : index
    %c0_9 = arith.constant 0 : index
    %9 = vector.load %arg0[%c0_8, %c1, %c0_9] : memref<2x18x72xbf16, #tpu.memory_space<vmem>>, vector<1x16x72xbf16>
    %10 = vector.shape_cast %9 : vector<1x16x72xbf16> to vector<16x72xbf16>
    %c1_10 = arith.constant 1 : index
    %c0_11 = arith.constant 0 : index
    %c0_12 = arith.constant 0 : index
    %11 = vector.load %arg1[%c1_10, %c0_11, %c0_12] : memref<3x72x128xbf16, #tpu.memory_space<vmem>>, vector<1x72x128xbf16>
    %12 = vector.shape_cast %11 : vector<1x72x128xbf16> to vector<72x128xbf16>
    %cst_13 = arith.constant dense<0.000000e+00> : vector<16x128xf32>
    %13 = tpu.matmul %10, %12, %cst_13 {dimension_numbers = #tpu.dot_dimension_numbers<[1], [0], [0], [1], [0, 0, 1, 1], [], []>} : vector<16x72xbf16>, vector<72x128xbf16>, vector<16x128xf32> -> vector<16x128xf32>
    %14 = arith.addf %8, %13 : vector<16x128xf32>
    %c0_14 = arith.constant 0 : index
    %c2 = arith.constant 2 : index
    %c0_15 = arith.constant 0 : index
    %15 = vector.load %arg0[%c0_14, %c2, %c0_15] : memref<2x18x72xbf16, #tpu.memory_space<vmem>>, vector<1x16x72xbf16>
    %16 = vector.shape_cast %15 : vector<1x16x72xbf16> to vector<16x72xbf16>
    %c2_16 = arith.constant 2 : index
    %c0_17 = arith.constant 0 : index
    %c0_18 = arith.constant 0 : index
    %17 = vector.load %arg1[%c2_16, %c0_17, %c0_18] : memref<3x72x128xbf16, #tpu.memory_space<vmem>>, vector<1x72x128xbf16>
    %18 = vector.shape_cast %17 : vector<1x72x128xbf16> to vector<72x128xbf16>
    %cst_19 = arith.constant dense<0.000000e+00> : vector<16x128xf32>
    %19 = tpu.matmul %16, %18, %cst_19 {dimension_numbers = #tpu.dot_dimension_numbers<[1], [0], [0], [1], [0, 0, 1, 1], [], []>} : vector<16x72xbf16>, vector<72x128xbf16>, vector<16x128xf32> -> vector<16x128xf32>
    %20 = arith.addf %14, %19 : vector<16x128xf32>
    %cst_20 = arith.constant dense<0.000000e+00> : vector<128xf32>
    %21 = vector.multi_reduction <add>, %20, %cst_20 [0] : vector<16x128xf32> to vector<128xf32>
    %22 = vector.shape_cast %21 : vector<128xf32> to vector<1x128xf32>
    %23 = arith.addf %0, %22 : vector<1x128xf32>
    %24 = arith.mulf %20, %20 : vector<16x128xf32>
    %cst_21 = arith.constant dense<0.000000e+00> : vector<128xf32>
    %25 = vector.multi_reduction <add>, %24, %cst_21 [0] : vector<16x128xf32> to vector<128xf32>
    %26 = vector.shape_cast %25 : vector<128xf32> to vector<1x128xf32>
    %27 = arith.addf %1, %26 : vector<1x128xf32>
    %cst_22 = arith.constant 0.000000e+00 : f32
    %28 = vector.broadcast %cst_22 : f32 to vector<16x128xf32>
    %c1_23 = arith.constant 1 : index
    %c0_24 = arith.constant 0 : index
    %c0_25 = arith.constant 0 : index
    %29 = vector.load %arg0[%c1_23, %c0_24, %c0_25] : memref<2x18x72xbf16, #tpu.memory_space<vmem>>, vector<1x16x72xbf16>
    %30 = vector.shape_cast %29 : vector<1x16x72xbf16> to vector<16x72xbf16>
    %c0_26 = arith.constant 0 : index
    %c0_27 = arith.constant 0 : index
    %c0_28 = arith.constant 0 : index
    %31 = vector.load %arg1[%c0_26, %c0_27, %c0_28] : memref<3x72x128xbf16, #tpu.memory_space<vmem>>, vector<1x72x128xbf16>
    %32 = vector.shape_cast %31 : vector<1x72x128xbf16> to vector<72x128xbf16>
    %cst_29 = arith.constant dense<0.000000e+00> : vector<16x128xf32>
    %33 = tpu.matmul %30, %32, %cst_29 {dimension_numbers = #tpu.dot_dimension_numbers<[1], [0], [0], [1], [0, 0, 1, 1], [], []>} : vector<16x72xbf16>, vector<72x128xbf16>, vector<16x128xf32> -> vector<16x128xf32>
    %34 = arith.addf %28, %33 : vector<16x128xf32>
    %c1_30 = arith.constant 1 : index
    %c1_31 = arith.constant 1 : index
    %c0_32 = arith.constant 0 : index
    %35 = vector.load %arg0[%c1_30, %c1_31, %c0_32] : memref<2x18x72xbf16, #tpu.memory_space<vmem>>, vector<1x16x72xbf16>
    %36 = vector.shape_cast %35 : vector<1x16x72xbf16> to vector<16x72xbf16>
    %c1_33 = arith.constant 1 : index
    %c0_34 = arith.constant 0 : index
    %c0_35 = arith.constant 0 : index
    %37 = vector.load %arg1[%c1_33, %c0_34, %c0_35] : memref<3x72x128xbf16, #tpu.memory_space<vmem>>, vector<1x72x128xbf16>
    %38 = vector.shape_cast %37 : vector<1x72x128xbf16> to vector<72x128xbf16>
    %cst_36 = arith.constant dense<0.000000e+00> : vector<16x128xf32>
    %39 = tpu.matmul %36, %38, %cst_36 {dimension_numbers = #tpu.dot_dimension_numbers<[1], [0], [0], [1], [0, 0, 1, 1], [], []>} : vector<16x72xbf16>, vector<72x128xbf16>, vector<16x128xf32> -> vector<16x128xf32>
    %40 = arith.addf %34, %39 : vector<16x128xf32>
    %c1_37 = arith.constant 1 : index
    %c2_38 = arith.constant 2 : index
    %c0_39 = arith.constant 0 : index
    %41 = vector.load %arg0[%c1_37, %c2_38, %c0_39] : memref<2x18x72xbf16, #tpu.memory_space<vmem>>, vector<1x16x72xbf16>
    %42 = vector.shape_cast %41 : vector<1x16x72xbf16> to vector<16x72xbf16>
    %c2_40 = arith.constant 2 : index
    %c0_41 = arith.constant 0 : index
    %c0_42 = arith.constant 0 : index
    %43 = vector.load %arg1[%c2_40, %c0_41, %c0_42] : memref<3x72x128xbf16, #tpu.memory_space<vmem>>, vector<1x72x128xbf16>
    %44 = vector.shape_cast %43 : vector<1x72x128xbf16> to vector<72x128xbf16>
    %cst_43 = arith.constant dense<0.000000e+00> : vector<16x128xf32>
    %45 = tpu.matmul %42, %44, %cst_43 {dimension_numbers = #tpu.dot_dimension_numbers<[1], [0], [0], [1], [0, 0, 1, 1], [], []>} : vector<16x72xbf16>, vector<72x128xbf16>, vector<16x128xf32> -> vector<16x128xf32>
    %46 = arith.addf %40, %45 : vector<16x128xf32>
    %cst_44 = arith.constant dense<0.000000e+00> : vector<128xf32>
    %47 = vector.multi_reduction <add>, %46, %cst_44 [0] : vector<16x128xf32> to vector<128xf32>
    %48 = vector.shape_cast %47 : vector<128xf32> to vector<1x128xf32>
    %49 = arith.addf %23, %48 : vector<1x128xf32>
    %50 = arith.mulf %46, %46 : vector<16x128xf32>
    %cst_45 = arith.constant dense<0.000000e+00> : vector<128xf32>
    %51 = vector.multi_reduction <add>, %50, %cst_45 [0] : vector<16x128xf32> to vector<128xf32>
    %52 = vector.shape_cast %51 : vector<128xf32> to vector<1x128xf32>
    %53 = arith.addf %27, %52 : vector<1x128xf32>
    %54 = tpu.concatenate %49, %53 in 0 : vector<1x128xf32>, vector<1x128xf32> -> vector<2x128xf32>
    %c0_46 = arith.constant 0 : index
    %c0_47 = arith.constant 0 : index
    %55 = vector.load %arg2[%c0_46, %c0_47] : memref<128x128xf32, #tpu.memory_space<vmem>>, vector<128x128xf32>
    %cst_48 = arith.constant dense<0.000000e+00> : vector<2x128xf32>
    %56 = tpu.matmul %54, %55, %cst_48 {dimension_numbers = #tpu.dot_dimension_numbers<[1], [0], [0], [1], [0, 0, 1, 1], [], []>} : vector<2x128xf32>, vector<128x128xf32>, vector<2x128xf32> -> vector<2x128xf32>
    %cst_49 = arith.constant 0.001953125 : f32
    %57 = vector.broadcast %cst_49 : f32 to vector<2x128xf32>
    %58 = arith.mulf %56, %57 : vector<2x128xf32>
    %59 = vector.extract_strided_slice %58 {offsets = [0, 0], sizes = [1, 128], strides = [1, 1]} : vector<2x128xf32> to vector<1x128xf32>
    %60 = vector.extract_strided_slice %58 {offsets = [1, 0], sizes = [1, 128], strides = [1, 1]} : vector<2x128xf32> to vector<1x128xf32>
    %61 = arith.mulf %59, %59 : vector<1x128xf32>
    %62 = arith.subf %60, %61 : vector<1x128xf32>
    %c0_50 = arith.constant 0 : index
    %c0_51 = arith.constant 0 : index
    %63 = vector.load %arg3[%c0_50, %c0_51] : memref<1x128xf32, #tpu.memory_space<vmem>>, vector<1x128xf32>
    %cst_52 = arith.constant 9.99999974E-6 : f32
    %64 = vector.broadcast %cst_52 : f32 to vector<1x128xf32>
    %65 = arith.addf %62, %64 : vector<1x128xf32>
    %66 = math.rsqrt %65 : vector<1x128xf32>
    %67 = arith.mulf %63, %66 : vector<1x128xf32>
    %c0_53 = arith.constant 0 : index
    %c0_54 = arith.constant 0 : index
    %68 = vector.load %arg4[%c0_53, %c0_54] : memref<1x128xf32, #tpu.memory_space<vmem>>, vector<1x128xf32>
    %69 = arith.mulf %59, %67 : vector<1x128xf32>
    %70 = arith.subf %68, %69 : vector<1x128xf32>
    %71 = vector.broadcast %67 : vector<1x128xf32> to vector<16x128xf32>
    %72 = arith.mulf %20, %71 : vector<16x128xf32>
    %73 = vector.broadcast %70 : vector<1x128xf32> to vector<16x128xf32>
    %74 = arith.addf %72, %73 : vector<16x128xf32>
    %cst_55 = arith.constant 0.000000e+00 : f32
    %75 = vector.broadcast %cst_55 : f32 to vector<16x128xf32>
    %76 = arith.maximumf %74, %75 : vector<16x128xf32>
    %c0_56 = arith.constant 0 : index
    %c0_57 = arith.constant 0 : index
    %c0_58 = arith.constant 0 : index
    %77 = vector.load %arg5[%c0_56, %c0_57, %c0_58] : memref<2x16x128xf32, #tpu.memory_space<vmem>>, vector<1x16x128xf32>
    %78 = vector.shape_cast %77 : vector<1x16x128xf32> to vector<16x128xf32>
    %79 = vector.shape_cast %76 : vector<16x128xf32> to vector<1x16x128xf32>
    tpu.vector_store %arg5[%c0_56, %c0_57, %c0_58], %79 {strides = array<i32>} : memref<2x16x128xf32, #tpu.memory_space<vmem>>, vector<1x16x128xf32>,
    %80 = vector.broadcast %67 : vector<1x128xf32> to vector<16x128xf32>
    %81 = arith.mulf %46, %80 : vector<16x128xf32>
    %82 = vector.broadcast %70 : vector<1x128xf32> to vector<16x128xf32>
    %83 = arith.addf %81, %82 : vector<16x128xf32>
    %cst_59 = arith.constant 0.000000e+00 : f32
    %84 = vector.broadcast %cst_59 : f32 to vector<16x128xf32>
    %85 = arith.maximumf %83, %84 : vector<16x128xf32>
    %c1_60 = arith.constant 1 : index
    %c0_61 = arith.constant 0 : index
    %c0_62 = arith.constant 0 : index
    %86 = vector.load %arg5[%c1_60, %c0_61, %c0_62] : memref<2x16x128xf32, #tpu.memory_space<vmem>>, vector<1x16x128xf32>
    %87 = vector.shape_cast %86 : vector<1x16x128xf32> to vector<16x128xf32>
    %88 = vector.shape_cast %85 : vector<16x128xf32> to vector<1x16x128xf32>
    tpu.vector_store %arg5[%c1_60, %c0_61, %c0_62], %88 {strides = array<i32>} : memref<2x16x128xf32, #tpu.memory_space<vmem>>, vector<1x16x128xf32>,
    return
  }
}

</mosaic_0001>

<llo_original>
// kernel: tpu_custom_call.1
$region0: #{tpu_custom_call.1}
  #allocation0 [shape = 'u32[]', space=smem, size = 0x4, offset = 0x4, fixed_abs, tag = 'smem constant byte address 0x4 - core index']
  #allocation1 [shape = 'u32[72,128]{1,0:T(1,128)}', space=vmem, size = 0x9000, scoped, tag = 'internal scratch']
  %s0 = inlined_call_operand.vmem [shape: bf16[2,18,72], index: 0, kind: input, shape index: {}]
  %s1 = inlined_call_operand.hbm [shape: bf16[3,72,128], index: 1, kind: input, shape index: {}]
  %s2 = inlined_call_operand.hbm [shape: f32[128,128], index: 2, kind: input, shape index: {}]
  %s3 = inlined_call_operand.vmem [shape: f32[1,128], index: 3, kind: input, shape index: {}]
  %s4 = inlined_call_operand.vmem [shape: f32[1,128], index: 4, kind: input, shape index: {}]
  %s5 = inlined_call_operand.hbm [shape: f32[2,16,128], index: 5, kind: output, shape index: {}]
  %s6 = sld [smem:[#allocation0]]
  $region38: #{tpu_custom_call.1} parent=0
    _
  %s8 = ssub.s32 1, %s6
  %s9 = scalar_select 0, %s8, %s6
  $region1: #{tpu_custom_call.1} parent=0
    #allocation2 [shape = 'u8[55296]{0}', space=vmem, size = 0xd800, scoped, tag = 'input window, operand 1, single buffered']
    #allocation3 [shape = 's32[1]{0}', space=sflag, size = 0x4, scoped, tag = 'scoped memory for tpu_custom_call.1']
    #allocation4 [shape = 's32[1]{0}', space=sflag, size = 0x4, scoped, tag = 'scoped memory for tpu_custom_call.1']
    #allocation5 [shape = 'u8[65536]{0}', space=vmem, size = 0x10000, scoped, tag = 'input window, operand 2, single buffered']
    #allocation6 [shape = 's32[1]{0}', space=sflag, size = 0x4, scoped, tag = 'scoped memory for tpu_custom_call.1']
    #allocation7 [shape = 'u8[16384]{0}', space=vmem, size = 0x4000, scoped, tag = 'output window, operand 0, single buffered']
    %10 = vsyncpa [#allocation3], 0
    %11 = vsyncpa [#allocation6], 0
    %12 = vsyncpa [#allocation4], 0
    // Predicated region
    $region2: #{tpu_custom_call.1} parent=1 // pred_check
      _
    $region3: #{tpu_custom_call.1} parent=1 // pred_check_branch
      %14 = sbr.rel (0) target = $region5
    $region4: #{tpu_custom_call.1} parent=1 // pred_region
      _
    $region5: #{tpu_custom_call.1} parent=1 // pred_fallthru
      _
    // Predicated region
    $region6: #{tpu_custom_call.1} parent=1 // pred_check
      _
    $region7: #{tpu_custom_call.1} parent=1 // pred_check_branch
      %16 = sbr.rel (0) target = $region9
    $region8: #{tpu_custom_call.1} parent=1 // pred_region
      %18 = vsyncadd [#allocation3], 0
      %s19 = sshll.u32 %s1, 4
      %s20 = int_to_ptr.hbm [resolvable:$true] %s19
      %s21 = sshll.u32 [#allocation2], 4
      %s22 = int_to_ptr.vmem [resolvable:$true] %s21
      %27 = dma.hbm_to_vmem [thread:$0]  %s20, 1728, %s22, [#allocation3], 64, 64, 4
    $region9: #{tpu_custom_call.1} parent=1 // pred_fallthru
      _
    // Predicated region
    $region10: #{tpu_custom_call.1} parent=1 // pred_check
      _
    $region11: #{tpu_custom_call.1} parent=1 // pred_check_branch
      %29 = sbr.rel (0) target = $region13
    $region12: #{tpu_custom_call.1} parent=1 // pred_region
      %31 = vsyncadd [#allocation6], 0
      %s32 = sshll.u32 %s2, 4
      %s33 = int_to_ptr.hbm [resolvable:$true] %s32
      %s34 = sshll.u32 [#allocation5], 4
      %s35 = int_to_ptr.vmem [resolvable:$true] %s34
      %40 = dma.hbm_to_vmem [thread:$0]  %s33, 2048, %s35, [#allocation6], 128, 128, 8
    $region13: #{tpu_custom_call.1} parent=1 // pred_fallthru
      _
    // Predicated region
    $region14: #{tpu_custom_call.1} parent=1 // pred_check
      _
    $region15: #{tpu_custom_call.1} parent=1 // pred_check_branch
      %42 = sbr.rel (0) target = $region17
    $region16: #{tpu_custom_call.1} parent=1 // pred_region
      _
    $region17: #{tpu_custom_call.1} parent=1 // pred_fallthru
      _
    // Predicated region
    $region18: #{tpu_custom_call.1} parent=1 // pred_check
      _
    $region19: #{tpu_custom_call.1} parent=1 // pred_check_branch
      %44 = sbr.rel (0) target = $region21
    $region20: #{tpu_custom_call.1} parent=1 // pred_region
      _
    $region21: #{tpu_custom_call.1} parent=1 // pred_fallthru
      _
    // Predicated region
    $region22: #{tpu_custom_call.1} parent=1 // pred_check
      _
    $region23: #{tpu_custom_call.1} parent=1 // pred_check_branch
      %46 = sbr.rel (0) target = $region25
    $region24: #{tpu_custom_call.1} parent=1 // pred_region
      %48 = dma.done [#allocation3], 1728
    $region25: #{tpu_custom_call.1} parent=1 // pred_fallthru
      _
    // Predicated region
    $region26: #{tpu_custom_call.1} parent=1 // pred_check
      _
    $region27: #{tpu_custom_call.1} parent=1 // pred_check_branch
      %50 = sbr.rel (0) target = $region29
    $region28: #{tpu_custom_call.1} parent=1 // pred_region
      %52 = dma.done [#allocation6], 2048
    $region29: #{tpu_custom_call.1} parent=1 // pred_fallthru
      _
    %v54 = vld [vmem:[%s0] sm:$0xf]
    %v55 = vld [vmem:[%s0 + $0x4] sm:$0xf]
    %v56 = vld [vmem:[#allocation2] sm:$0xf]
    %v57 = vld [vmem:[#allocation2 + $0x4] sm:$0xf]
    %v58 = vld [vmem:[#allocation2 + $0x8] sm:$0xf]
    %v59 = vld [vmem:[#allocation2 + $0xc] sm:$0xf]
    %v60 = vld [vmem:[#allocation2 + $0x10] sm:$0xf]
    %v61 = vld [vmem:[#allocation2 + $0x14] sm:$0xf]
    %v62 = vld [vmem:[#allocation2 + $0x18] sm:$0xf]
    %v63 = vld [vmem:[#allocation2 + $0x1c] sm:$0xf]
    %v64 = vld [vmem:[#allocation2 + $0x20] sm:$0xf]
    %v65 = vld [vmem:[%s0 + $0x8] sm:$0x1]
    %s66 = scalar_lea.vmem [#allocation2], 36
    %v67 = vld [vmem:[%s66] sm:$0xf]
    %v68 = vld [vmem:[%s66 + $0x4] sm:$0xf]
    %v69 = vld [vmem:[%s66 + $0x8] sm:$0xf]
    %v70 = vld [vmem:[%s66 + $0xc] sm:$0xf]
    %v71 = vld [vmem:[%s66 + $0x10] sm:$0xf]
    %v72 = vld [vmem:[%s66 + $0x14] sm:$0xf]
    %v73 = vld [vmem:[%s66 + $0x18] sm:$0xf]
    %v74 = vld [vmem:[%s66 + $0x1c] sm:$0xf]
    %v75 = vld [vmem:[%s66 + $0x20] sm:$0xf]
    %v79 = vunpack.c.l.b16 %v54
    %v80 = vunpack.c.l.b16 %v55
    %v81 = vunpack.c.l.b16 %v65
    %v82 = vpack.c.b16 %v80, %v79
    %v83 = vpack.c.b16 %v81, %v81
    %vm84 = vsmask.f32 7424
    %v86 = vshrl.u32 %v82, 16
    %v88 = vshll.u32 %v82, 16
    %v90 = vrot.slane %v88, 1
    %v91 = vor.u32 %v86, %v90
    %v93 = vshll.u32 %v83, 16
    %v95 = vrot.slane %v93, 1
    %v96 = vsel %vm84, %v91, %v95
    %v106 = vunpack.c.l.b16 %v67
    %v107 = vunpack.c.l.b16 %v68
    %v108 = vunpack.c.l.b16 %v69
    %v109 = vunpack.c.l.b16 %v70
    %v110 = vunpack.c.l.b16 %v71
    %v111 = vunpack.c.l.b16 %v72
    %v112 = vunpack.c.l.b16 %v73
    %v113 = vunpack.c.l.b16 %v74
    %v114 = vunpack.c.l.b16 %v75
    %v115 = vpack.c.b16 %v107, %v106
    %v116 = vpack.c.b16 %v109, %v108
    %v117 = vpack.c.b16 %v111, %v110
    %v118 = vpack.c.b16 %v113, %v112
    %v119 = vpack.c.b16 %v114, %v114
    %vm124 = vcmask 588800
    %v126 = vsel %vm124, %v96, 0
    %vm128 = vcmask 1043456
    %v130 = vsel %vm128, %v119, 0
    %132 = vmatpush.bf16.msra.mxu0 0
    %133 = vmatpush.bf16.msra.mxu0 0
    %134 = vmatpush.bf16.msra.mxu0 0
    %135 = vmatpush.bf16.msra.mxu0 %v130
    %136 = vmatpush.bf16.msra.mxu0 %v118
    %137 = vmatpush.bf16.msra.mxu0 %v117
    %138 = vmatpush.bf16.msra.mxu0 %v116
    %139 = vmatpush.bf16.msra.mxu0 %v115
    %140 = vmatmul.bf16.gmra.mxu0 %v126
    %v141 = vpop.f32.mrf.mxu0
    %v142 = vadd.f32 0.0, %v141
    %v143 = vpop.f32.mrf.mxu0
    %v144 = vadd.f32 0.0, %v143
    %145 = vdwg.mxu0
    %v155 = vunpack.c.l.b16 %v56
    %v156 = vunpack.c.l.b16 %v57
    %v157 = vunpack.c.l.b16 %v58
    %v158 = vunpack.c.l.b16 %v59
    %v159 = vunpack.c.l.b16 %v60
    %v160 = vunpack.c.l.b16 %v61
    %v161 = vunpack.c.l.b16 %v62
    %v162 = vunpack.c.l.b16 %v63
    %v163 = vunpack.c.l.b16 %v64
    %v164 = vpack.c.b16 %v156, %v155
    %v165 = vpack.c.b16 %v158, %v157
    %v166 = vpack.c.b16 %v160, %v159
    %v167 = vpack.c.b16 %v162, %v161
    %v168 = vpack.c.b16 %v163, %v163
    %v173 = vsel %vm124, %v82, 0
    %v176 = vsel %vm128, %v168, 0
    %178 = vmatpush.bf16.msra.mxu0 0
    %179 = vmatpush.bf16.msra.mxu0 0
    %180 = vmatpush.bf16.msra.mxu0 0
    %181 = vmatpush.bf16.msra.mxu0 %v176
    %182 = vmatpush.bf16.msra.mxu0 %v167
    %183 = vmatpush.bf16.msra.mxu0 %v166
    %184 = vmatpush.bf16.msra.mxu0 %v165
    %185 = vmatpush.bf16.msra.mxu0 %v164
    %186 = vmatmul.bf16.gmra.mxu0 %v173
    %v187 = vpop.f32.mrf.mxu0
    %v188 = vadd.f32 %v142, %v187
    %v189 = vpop.f32.mrf.mxu0
    %v190 = vadd.f32 %v144, %v189
    %191 = vdwg.mxu0
    %v192 = vld [vmem:[%s0] sm:$0xe]
    %s193 = scalar_lea.vmem [#allocation2], 72
    %v194 = vld [vmem:[%s193] sm:$0xf]
    %v195 = vld [vmem:[%s193 + $0x4] sm:$0xf]
    %v196 = vld [vmem:[%s193 + $0x8] sm:$0xf]
    %v197 = vld [vmem:[%s193 + $0xc] sm:$0xf]
    %v198 = vld [vmem:[%s193 + $0x10] sm:$0xf]
    %v199 = vld [vmem:[%s193 + $0x14] sm:$0xf]
    %v200 = vld [vmem:[%s193 + $0x18] sm:$0xf]
    %v201 = vld [vmem:[%s193 + $0x1c] sm:$0xf]
    %v202 = vld [vmem:[%s193 + $0x20] sm:$0xf]
    %v204 = vunpack.c.l.b16 %v192
    %v205 = vpack.c.b16 %v80, %v204
    %vm206 = vcmask 1046528
    %v207 = vrot.slane %v205, 1
    %v208 = vrot.slane %v83, 1
    %v209 = vsel %vm206, %v207, %v208
    %v219 = vunpack.c.l.b16 %v194
    %v220 = vunpack.c.l.b16 %v195
    %v221 = vunpack.c.l.b16 %v196
    %v222 = vunpack.c.l.b16 %v197
    %v223 = vunpack.c.l.b16 %v198
    %v224 = vunpack.c.l.b16 %v199
    %v225 = vunpack.c.l.b16 %v200
    %v226 = vunpack.c.l.b16 %v201
    %v227 = vunpack.c.l.b16 %v202
    %v228 = vpack.c.b16 %v220, %v219
    %v229 = vpack.c.b16 %v222, %v221
    %v230 = vpack.c.b16 %v224, %v223
    %v231 = vpack.c.b16 %v226, %v225
    %v232 = vpack.c.b16 %v227, %v227
    %v238 = vsel %vm124, %v209, 0
    %v241 = vsel %vm128, %v232, 0
    %243 = vmatpush.bf16.msra.mxu0 0
    %244 = vmatpush.bf16.msra.mxu0 0
    %245 = vmatpush.bf16.msra.mxu0 0
    %246 = vmatpush.bf16.msra.mxu0 %v241
    %247 = vmatpush.bf16.msra.mxu0 %v231
    %248 = vmatpush.bf16.msra.mxu0 %v230
    %249 = vmatpush.bf16.msra.mxu0 %v229
    %250 = vmatpush.bf16.msra.mxu0 %v228
    %251 = vmatmul.bf16.gmra.mxu0 %v238
    %v252 = vpop.f32.mrf.mxu0
    %v253 = vadd.f32 0.0, %v252
    %v254 = vpop.f32.mrf.mxu0
    %v255 = vadd.f32 0.0, %v254
    %256 = vdwg.mxu0
    %v257 = vadd.f32 %v188, %v253
    %v258 = vadd.f32 %v190, %v255
    %v259 = vadd.f32 %v257, %v258
    %v260 = vrot.slane %v259, 4
    %v261 = vadd.f32 %v259, %v260
    %v262 = vrot.slane %v261, 2
    %v263 = vadd.f32 %v261, %v262
    %v264 = vrot.slane %v263, 1
    %v265 = vadd.f32 %v263, %v264
    %v266 = vadd.f32 %v265, 0.0
    %v267 = vmul.f32 %v257, %v257
    %v268 = vmul.f32 %v258, %v258
    %v269 = vadd.f32 %v267, %v268
    %v270 = vrot.slane %v269, 4
    %v271 = vadd.f32 %v269, %v270
    %v272 = vrot.slane %v271, 2
    %v273 = vadd.f32 %v271, %v272
    %v274 = vrot.slane %v273, 1
    %v275 = vadd.f32 %v273, %v274
    %v276 = vadd.f32 %v275, 0.0
    %s277 = scalar_lea.vmem %s0, 12
    %v278 = vld [vmem:[%s277] sm:$0xf]
    %v279 = vld [vmem:[%s277 + $0x4] sm:$0xf]
    %v280 = vld [vmem:[%s277 + $0x8] sm:$0x1]
    %v284 = vunpack.c.l.b16 %v278
    %v285 = vunpack.c.l.b16 %v279
    %v286 = vunpack.c.l.b16 %v280
    %v287 = vpack.c.b16 %v285, %v284
    %v288 = vpack.c.b16 %v286, %v286
    %v290 = vshrl.u32 %v287, 16
    %v292 = vshll.u32 %v287, 16
    %v294 = vrot.slane %v292, 1
    %v295 = vor.u32 %v290, %v294
    %v297 = vshll.u32 %v288, 16
    %v299 = vrot.slane %v297, 1
    %v300 = vsel %vm84, %v295, %v299
    %v302 = vsel %vm124, %v300, 0
    %304 = vmatpush.bf16.msra.mxu0 0
    %305 = vmatpush.bf16.msra.mxu0 0
    %306 = vmatpush.bf16.msra.mxu0 0
    %307 = vmatpush.bf16.msra.mxu0 %v130
    %308 = vmatpush.bf16.msra.mxu0 %v118
    %309 = vmatpush.bf16.msra.mxu0 %v117
    %310 = vmatpush.bf16.msra.mxu0 %v116
    %311 = vmatpush.bf16.msra.mxu0 %v115
    %312 = vmatmul.bf16.gmra.mxu0 %v302
    %v313 = vpop.f32.mrf.mxu0
    %v314 = vadd.f32 0.0, %v313
    %v315 = vpop.f32.mrf.mxu0
    %v316 = vadd.f32 0.0, %v315
    %317 = vdwg.mxu0
    %v318 = vsel %vm124, %v287, 0
    %320 = vmatpush.bf16.msra.mxu0 0
    %321 = vmatpush.bf16.msra.mxu0 0
    %322 = vmatpush.bf16.msra.mxu0 0
    %323 = vmatpush.bf16.msra.mxu0 %v176
    %324 = vmatpush.bf16.msra.mxu0 %v167
    %325 = vmatpush.bf16.msra.mxu0 %v166
    %326 = vmatpush.bf16.msra.mxu0 %v165
    %327 = vmatpush.bf16.msra.mxu0 %v164
    %328 = vmatmul.bf16.gmra.mxu0 %v318
    %v329 = vpop.f32.mrf.mxu0
    %v330 = vadd.f32 %v314, %v329
    %v331 = vpop.f32.mrf.mxu0
    %v332 = vadd.f32 %v316, %v331
    %333 = vdwg.mxu0
    %v334 = vld [vmem:[%s277] sm:$0xe]
    %v336 = vunpack.c.l.b16 %v334
    %v337 = vpack.c.b16 %v285, %v336
    %v338 = vrot.slane %v337, 1
    %v339 = vrot.slane %v288, 1
    %v340 = vsel %vm206, %v338, %v339
    %v342 = vsel %vm124, %v340, 0
    %344 = vmatpush.bf16.msra.mxu0 0
    %345 = vmatpush.bf16.msra.mxu0 0
    %346 = vmatpush.bf16.msra.mxu0 0
    %347 = vmatpush.bf16.msra.mxu0 %v241
    %348 = vmatpush.bf16.msra.mxu0 %v231
    %349 = vmatpush.bf16.msra.mxu0 %v230
    %350 = vmatpush.bf16.msra.mxu0 %v229
    %351 = vmatpush.bf16.msra.mxu0 %v228
    %352 = vmatmul.bf16.gmra.mxu0 %v342
    %v353 = vpop.f32.mrf.mxu0
    %v354 = vadd.f32 0.0, %v353
    %v355 = vpop.f32.mrf.mxu0
    %v356 = vadd.f32 0.0, %v355
    %357 = vdwg.mxu0
    %v358 = vadd.f32 %v330, %v354
    %v359 = vadd.f32 %v332, %v356
    %v360 = vadd.f32 %v358, %v359
    %v361 = vrot.slane %v360, 4
    %v362 = vadd.f32 %v360, %v361
    %v363 = vrot.slane %v362, 2
    %v364 = vadd.f32 %v362, %v363
    %v365 = vrot.slane %v364, 1
    %v366 = vadd.f32 %v364, %v365
    %v367 = vadd.f32 %v266, %v366
    %v368 = vmul.f32 %v358, %v358
    %v369 = vmul.f32 %v359, %v359
    %v370 = vadd.f32 %v368, %v369
    %v371 = vrot.slane %v370, 4
    %v372 = vadd.f32 %v370, %v371
    %v373 = vrot.slane %v372, 2
    %v374 = vadd.f32 %v372, %v373
    %v375 = vrot.slane %v374, 1
    %v376 = vadd.f32 %v374, %v375
    %v377 = vadd.f32 %v276, %v376
    %vm378 = vcmask 1040384
    %v379 = vsel %vm378, %v367, %v377
    %v380 = vld [vmem:[#allocation5] sm:$0xff]
    %v381 = vld [vmem:[#allocation5 + $0x8] sm:$0xff]
    %v382 = vld [vmem:[#allocation5 + $0x10] sm:$0xff]
    %v383 = vld [vmem:[#allocation5 + $0x18] sm:$0xff]
    %v384 = vld [vmem:[#allocation5 + $0x20] sm:$0xff]
    %v385 = vld [vmem:[#allocation5 + $0x28] sm:$0xff]
    %v386 = vld [vmem:[#allocation5 + $0x30] sm:$0xff]
    %v387 = vld [vmem:[#allocation5 + $0x38] sm:$0xff]
    %v388 = vld [vmem:[#allocation5 + $0x40] sm:$0xff]
    %v389 = vld [vmem:[#allocation5 + $0x48] sm:$0xff]
    %v390 = vld [vmem:[#allocation5 + $0x50] sm:$0xff]
    %v391 = vld [vmem:[#allocation5 + $0x58] sm:$0xff]
    %v392 = vld [vmem:[#allocation5 + $0x60] sm:$0xff]
    %v393 = vld [vmem:[#allocation5 + $0x68] sm:$0xff]
    %v394 = vld [vmem:[#allocation5 + $0x70] sm:$0xff]
    %v395 = vld [vmem:[#allocation5 + $0x78] sm:$0xff]
    %396 = vmatpush.msra.mxu0 %v395
    %397 = vmatpush.msra.mxu0 %v394
    %398 = vmatpush.msra.mxu0 %v393
    %399 = vmatpush.msra.mxu0 %v392
    %400 = vmatpush.msra.mxu0 %v391
    %401 = vmatpush.msra.mxu0 %v390
    %402 = vmatpush.msra.mxu0 %v389
    %403 = vmatpush.msra.mxu0 %v388
    %404 = vmatpush.msra.mxu0 %v387
    %405 = vmatpush.msra.mxu0 %v386
    %406 = vmatpush.msra.mxu0 %v385
    %407 = vmatpush.msra.mxu0 %v384
    %408 = vmatpush.msra.mxu0 %v383
    %409 = vmatpush.msra.mxu0 %v382
    %410 = vmatpush.msra.mxu0 %v381
    %411 = vmatpush.msra.mxu0 %v380
    %412 = vmatmul.f32.gmra.mxu0 %v379
    %v413 = vpop.f32.mrf.mxu0
    %v414 = vadd.f32 0.0, %v413
    %415 = vdwg.mxu0
    %v416 = vmul.f32 %v414, 0.001953125
    %v417 = vmul.f32 %v416, %v416
    %v419 = vrot.slane %v417, 7
    %v421 = vsub.f32 %v416, %v419
    %v422 = vld [vmem:[%s3] sm:$0x1]
    %v423 = vadd.f32 %v421, 1e-05
    %v424 = vrsqrt.pop %v423
    %v425 = vmul.f32 %v424, %v423
    %v426 = vmul.f32 %v425, %v424
    %v427 = vmul.f32 0.5, %v426
    %v428 = vsub.f32 1.5, %v427
    %v429 = vmul.f32 %v424, %v428
    %vm430 = vweird.f32 %v423
    %vm431 = vweird.f32 %v424
    %vm432 = vmor %vm430, %vm431
    %v433 = vsel %vm432, %v424, %v429
    %435 = vst [vmem:[#allocation1] sm:$0xff] %v433
    %s436 = scalar_lea.vmem [#allocation1], 1
    %v437 = vld [vmem:[%s436] ss:$9 sm:$0xff]
    %v439 = vmul.f32 %v422, %v437
    %v440 = vld [vmem:[%s4] sm:$0x1]
    %v441 = vmul.f32 %v416, %v439
    %v442 = vsub.f32 %v440, %v441
    %v444 = vperm.slane %v439, 0
    %v446 = vmul.f32 %v257, %v444
    %v447 = vmul.f32 %v258, %v444
    %v449 = vperm.slane %v442, 0
    %v451 = vadd.f32 %v446, %v449
    %v452 = vadd.f32 %v447, %v449
    %v453 = vmax.f32 %v451, 0.0
    %v454 = vmax.f32 %v452, 0.0
    %455 = vst [vmem:[#allocation7] sm:$0xff] %v453
    %456 = vst [vmem:[#allocation7 + $0x8] sm:$0xff] %v454
    %v457 = vmul.f32 %v358, %v444
    %v458 = vmul.f32 %v359, %v444
    %v459 = vadd.f32 %v457, %v449
    %v460 = vadd.f32 %v458, %v449
    %v461 = vmax.f32 %v459, 0.0
    %v462 = vmax.f32 %v460, 0.0
    %s463 = scalar_lea.vmem [#allocation7], 16
    %464 = vst [vmem:[%s463] sm:$0xff] %v461
    %465 = vst [vmem:[%s463 + $0x8] sm:$0xff] %v462
    // Predicated region
    $region30: #{tpu_custom_call.1} parent=1 // pred_check
      _
    $region31: #{tpu_custom_call.1} parent=1 // pred_check_branch
      %467 = sbr.rel (0) target = $region33
    $region32: #{tpu_custom_call.1} parent=1 // pred_region
      %469 = vsyncadd [#allocation4], 0
      %s470 = sshll.u32 [#allocation7], 4
      %s471 = int_to_ptr.vmem [resolvable:$true] %s470
      %s472 = sshll.u32 %s5, 4
      %s473 = int_to_ptr.hbm [resolvable:$true] %s472
      %478 = dma.vmem_to_hbm [thread:$0]  %s471, 512, %s473, [#allocation4], 128, 128, 8
    $region33: #{tpu_custom_call.1} parent=1 // pred_fallthru
      _
    // Predicated region
    $region34: #{tpu_custom_call.1} parent=1 // pred_check
      _
    $region35: #{tpu_custom_call.1} parent=1 // pred_check_branch
      %480 = sbr.rel (0) target = $region37
    $region36: #{tpu_custom_call.1} parent=1 // pred_region
      %482 = dma.done [#allocation4], 512
    $region37: #{tpu_custom_call.1} parent=1 // pred_fallthru
      _
    %483 = vsyncpa [#allocation3], 1
    %484 = vsyncpa [#allocation6], 1
    %485 = vsyncpa [#allocation4], 1

</llo_original>
